<compile_context>
chip_gen: v7x
topology: tpu7x:2x2x1
jax: 0.10.0
libtpu: 0.0.40
codegen_flags: <defaults>
</compile_context>

<pallas_src>
from functools import partial

import jax
import jax.numpy as jnp
from jax.experimental import pallas as pl
from jax.experimental.pallas import tpu as pltpu


def _round_up(x, m):
    return ((x + m - 1) // m) * m


def _choose_tile_b(batch, classes):
    """Pick a batch-tile size keeping ~12 live [TB, C] f32 buffers
    (2 inputs x 2 pipeline buffers + ~8 temporaries) under ~12 MiB so the
    pipelined kernel fits the default scoped-VMEM limit on v5e/v6e/v7x."""
    budget_bytes = 12 * 1024 * 1024
    max_tb = budget_bytes // (12 * 4 * max(classes, 1))
    tb = max(8, min(512, (max_tb // 8) * 8))
    tb = min(tb, _round_up(batch, 8))
    # TODO(synk): for very large C (LLM vocab) also tile the class axis with a
    # two-pass / online-softmax structure; this kernel assumes [TB, C] fits VMEM.
    return tb


def gkd_kernel(ys_ref, yt_ref, label_ref, mask_ref, kl_ref, *, inv_t):
    ys = ys_ref[...].astype(jnp.float32) * inv_t           # [TB, C]
    yt = yt_ref[...].astype(jnp.float32) * inv_t           # [TB, C]
    tb, c = ys.shape

    # student log_softmax over classes (dim=1)
    ys_shift = ys - jnp.max(ys, axis=1, keepdims=True)
    s = ys_shift - jnp.log(jnp.sum(jnp.exp(ys_shift), axis=1, keepdims=True))

    # teacher softmax / log_softmax over classes (dim=1)
    yt_max = jnp.max(yt, axis=1, keepdims=True)
    yt_shift = yt - yt_max
    e = jnp.exp(yt_shift)
    denom = jnp.sum(e, axis=1, keepdims=True)               # [TB, 1]
    t = e * pl.reciprocal(denom, approx=False)              # softmax(y_t / T)
    log_t = yt_shift - jnp.log(denom)                       # log softmax(y_t / T)

    # teacher argmax (first max index), computed directly on yt (monotone in t)
    col = jax.lax.broadcasted_iota(jnp.int32, (tb, c), 1)
    cand = jnp.where(yt == yt_max, col, jnp.int32(c))
    t_argmax = jnp.min(cand, axis=1, keepdims=True)         # [TB, 1] int32

    mask = (label_ref[...] == t_argmax).astype(jnp.float32)  # [TB, 1]

    # per-row KL, mask applied after the reduction (narrow [TB,1] multiply)
    g = t * (log_t - s)                                      # [TB, C]
    kl_row = jnp.sum(g, axis=1, keepdims=True)               # [TB, 1]

    mask_ref[...] = mask
    kl_ref[...] = mask * kl_row


def gkd_forward(y_s, y_t, label, temperature):
    """Returns (loss_scalar, error_index_list) matching GKD.forward."""
    B, C = y_s.shape
    T = float(temperature)

    tb = _choose_tile_b(B, C)
    b_pad = _round_up(B, tb)
    num_tiles = b_pad // tb

    label2d = label.astype(jnp.int32).reshape(B, 1)
    if b_pad != B:
        pad = b_pad - B
        # padded rows: zero logits + label=-1 -> mask 0 -> contribute nothing
        y_s = jnp.pad(y_s, ((0, pad), (0, 0)))
        y_t = jnp.pad(y_t, ((0, pad), (0, 0)))
        label2d = jnp.pad(label2d, ((0, pad), (0, 0)), constant_values=-1)

    mask, kl_rows = pl.pallas_call(
        partial(gkd_kernel, inv_t=1.0 / T),
        out_shape=(
            jax.ShapeDtypeStruct((b_pad, 1), jnp.float32),
            jax.ShapeDtypeStruct((b_pad, 1), jnp.float32),
        ),
        grid=(num_tiles,),
        in_specs=[
            pl.BlockSpec((tb, C), lambda i: (i, 0)),
            pl.BlockSpec((tb, C), lambda i: (i, 0)),
            pl.BlockSpec((tb, 1), lambda i: (i, 0)),
        ],
        out_specs=(
            pl.BlockSpec((tb, 1), lambda i: (i, 0)),
            pl.BlockSpec((tb, 1), lambda i: (i, 0)),
        ),
        compiler_params=pltpu.CompilerParams(
            dimension_semantics=("parallel",),
            vmem_limit_bytes=32 * 1024 * 1024,
        ),
    )(y_s, y_t, label2d)

    count = jnp.sum(mask)  # padded rows contribute 0
    # Matches the PyTorch module exactly (no guard): count == 0 -> inf/nan.
    loss = jnp.sum(kl_rows) * (T * T) / count

    # glue: error_index as a Python list, like the torch code (device->host sync)
    mask_rows = mask[:B, 0]
    error_index = [int(i) for i in jnp.where(mask_rows == 0)[0].tolist()]
    return loss, error_index


if __name__ == "__main__":
    key = jax.random.PRNGKey(0)
    B, C = 8, 32
    T = 4.0

    k1, k2, k3 = jax.random.split(key, 3)
    y_s = jax.random.normal(k1, (B, C), jnp.float32)
    y_t = jax.random.normal(k2, (B, C), jnp.float32)

    # Build labels so some rows match the teacher argmax (count > 0), like a
    # realistic distillation batch (avoids divide-by-zero, same as torch).
    teacher_argmax = jnp.argmax(y_t, axis=1).astype(jnp.int32)
    rand_label = jax.random.randint(k3, (B,), 0, C, jnp.int32)
    label = jnp.where(jnp.arange(B) % 2 == 0, teacher_argmax, rand_label)

    loss, error_index = gkd_forward(y_s, y_t, label, T)
    jax.block_until_ready(loss)

    # pure-JAX reference sanity check
    s_ref = jax.nn.log_softmax(y_s / T, axis=1)
    t_ref = jax.nn.softmax(y_t / T, axis=1)
    m_ref = (label == jnp.argmax(t_ref, axis=1)).astype(jnp.float32)
    cnt = jnp.sum(m_ref)
    kl_ref = jnp.sum(m_ref[:, None] * (t_ref * (jnp.log(t_ref) - s_ref)))
    loss_ref = kl_ref * T * T / cnt
    assert jnp.allclose(loss, loss_ref, rtol=1e-5, atol=1e-5), (loss, loss_ref)
    err_ref = [int(i) for i in jnp.where(m_ref == 0)[0].tolist()]
    assert error_index == err_ref

    print("KERNEL_OK")
</pallas_src>

<mosaic_0001>
module attributes {stable_mosaic.version = 11 : i64} {
  func.func @gkd_kernel(%arg0: i32, %arg1: memref<8x32xf32, #tpu.memory_space<vmem>>, %arg2: memref<8x32xf32, #tpu.memory_space<vmem>>, %arg3: memref<8x1xi32, #tpu.memory_space<vmem>>, %arg4: memref<8x1xf32, #tpu.memory_space<vmem>>, %arg5: memref<8x1xf32, #tpu.memory_space<vmem>>) attributes {dimension_semantics = [#tpu.dimension_semantics<parallel>], iteration_bounds = array<i64: 1>, scalar_prefetch = 0 : i64, scratch_operands = 0 : i64, tpu.core_type = #tpu.core_type<tc>, window_params = [{transform_indices = @transform_0, window_bounds = array<i64: 8, 32>}, {transform_indices = @transform_1, window_bounds = array<i64: 8, 32>}, {transform_indices = @transform_2, window_bounds = array<i64: 8, 1>}, {transform_indices = @transform_3, window_bounds = array<i64: 8, 1>}, {transform_indices = @transform_4, window_bounds = array<i64: 8, 1>}]} {
    %c0 = arith.constant 0 : index
    %c0_0 = arith.constant 0 : index
    %0 = vector.load %arg1[%c0, %c0_0] : memref<8x32xf32, #tpu.memory_space<vmem>>, vector<8x32xf32>
    %cst = arith.constant 2.500000e-01 : f32
    %1 = vector.broadcast %cst : f32 to vector<8x32xf32>
    %2 = arith.mulf %0, %1 : vector<8x32xf32>
    %c0_1 = arith.constant 0 : index
    %c0_2 = arith.constant 0 : index
    %3 = vector.load %arg2[%c0_1, %c0_2] : memref<8x32xf32, #tpu.memory_space<vmem>>, vector<8x32xf32>
    %cst_3 = arith.constant 2.500000e-01 : f32
    %4 = vector.broadcast %cst_3 : f32 to vector<8x32xf32>
    %5 = arith.mulf %3, %4 : vector<8x32xf32>
    %cst_4 = arith.constant dense<0xFF800000> : vector<8xf32>
    %6 = vector.multi_reduction <maximumf>, %2, %cst_4 [1] : vector<8x32xf32> to vector<8xf32>
    %7 = vector.shape_cast %6 : vector<8xf32> to vector<8x1xf32>
    %8 = vector.broadcast %7 : vector<8x1xf32> to vector<8x32xf32>
    %9 = arith.subf %2, %8 : vector<8x32xf32>
    %10 = math.exp %9 : vector<8x32xf32>
    %cst_5 = arith.constant dense<0.000000e+00> : vector<8xf32>
    %11 = vector.multi_reduction <add>, %10, %cst_5 [1] : vector<8x32xf32> to vector<8xf32>
    %12 = vector.shape_cast %11 : vector<8xf32> to vector<8x1xf32>
    %13 = math.log %12 : vector<8x1xf32>
    %14 = vector.broadcast %13 : vector<8x1xf32> to vector<8x32xf32>
    %15 = arith.subf %9, %14 : vector<8x32xf32>
    %cst_6 = arith.constant dense<0xFF800000> : vector<8xf32>
    %16 = vector.multi_reduction <maximumf>, %5, %cst_6 [1] : vector<8x32xf32> to vector<8xf32>
    %17 = vector.shape_cast %16 : vector<8xf32> to vector<8x1xf32>
    %18 = vector.broadcast %17 : vector<8x1xf32> to vector<8x32xf32>
    %19 = arith.subf %5, %18 : vector<8x32xf32>
    %20 = math.exp %19 : vector<8x32xf32>
    %cst_7 = arith.constant dense<0.000000e+00> : vector<8xf32>
    %21 = vector.multi_reduction <add>, %20, %cst_7 [1] : vector<8x32xf32> to vector<8xf32>
    %22 = vector.shape_cast %21 : vector<8xf32> to vector<8x1xf32>
    %23 = tpu.reciprocal %22 : vector<8x1xf32> -> vector<8x1xf32>
    %24 = vector.broadcast %23 : vector<8x1xf32> to vector<8x32xf32>
    %25 = arith.mulf %20, %24 : vector<8x32xf32>
    %26 = math.log %22 : vector<8x1xf32>
    %27 = vector.broadcast %26 : vector<8x1xf32> to vector<8x32xf32>
    %28 = arith.subf %19, %27 : vector<8x32xf32>
    %29 = tpu.iota {dimensions = array<i32: 1>} : vector<8x32xi32>
    %30 = vector.broadcast %17 : vector<8x1xf32> to vector<8x32xf32>
    %31 = arith.cmpf oeq, %5, %30 : vector<8x32xf32>
    %c32_i32 = arith.constant 32 : i32
    %32 = vector.broadcast %c32_i32 : i32 to vector<8x32xi32>
    %33 = arith.select %31, %29, %32 : vector<8x32xi1>, vector<8x32xi32>
    %cst_8 = arith.constant dense<2147483647> : vector<8xi32>
    %34 = vector.multi_reduction <minsi>, %33, %cst_8 [1] : vector<8x32xi32> to vector<8xi32>
    %35 = vector.shape_cast %34 : vector<8xi32> to vector<8x1xi32>
    %c0_9 = arith.constant 0 : index
    %c0_10 = arith.constant 0 : index
    %36 = vector.load %arg3[%c0_9, %c0_10] : memref<8x1xi32, #tpu.memory_space<vmem>>, vector<8x1xi32>
    %37 = arith.cmpi eq, %36, %35 : vector<8x1xi32>
    %38 = arith.extui %37 : vector<8x1xi1> to vector<8x1xi32>
    %39 = arith.sitofp %38 : vector<8x1xi32> to vector<8x1xf32>
    %40 = arith.subf %28, %15 : vector<8x32xf32>
    %41 = arith.mulf %25, %40 : vector<8x32xf32>
    %cst_11 = arith.constant dense<0.000000e+00> : vector<8xf32>
    %42 = vector.multi_reduction <add>, %41, %cst_11 [1] : vector<8x32xf32> to vector<8xf32>
    %43 = vector.shape_cast %42 : vector<8xf32> to vector<8x1xf32>
    %c0_12 = arith.constant 0 : index
    %c0_13 = arith.constant 0 : index
    %44 = vector.load %arg4[%c0_12, %c0_13] : memref<8x1xf32, #tpu.memory_space<vmem>>, vector<8x1xf32>
    tpu.vector_store %arg4[%c0_12, %c0_13], %39 {strides = array<i32>} : memref<8x1xf32, #tpu.memory_space<vmem>>, vector<8x1xf32>,
    %45 = arith.mulf %39, %43 : vector<8x1xf32>
    %c0_14 = arith.constant 0 : index
    %c0_15 = arith.constant 0 : index
    %46 = vector.load %arg5[%c0_14, %c0_15] : memref<8x1xf32, #tpu.memory_space<vmem>>, vector<8x1xf32>
    tpu.vector_store %arg5[%c0_14, %c0_15], %45 {strides = array<i32>} : memref<8x1xf32, #tpu.memory_space<vmem>>, vector<8x1xf32>,
    return
  }
  func.func @transform_0(%arg0: i32) -> (i32, i32) {
    %c0_i32 = arith.constant 0 : i32
    %c0_i32_0 = arith.constant 0 : i32
    return %arg0, %c0_i32 : i32, i32
  }
  func.func @transform_1(%arg0: i32) -> (i32, i32) {
    %c0_i32 = arith.constant 0 : i32
    %c0_i32_0 = arith.constant 0 : i32
    return %arg0, %c0_i32 : i32, i32
  }
  func.func @transform_2(%arg0: i32) -> (i32, i32) {
    %c0_i32 = arith.constant 0 : i32
    %c0_i32_0 = arith.constant 0 : i32
    return %arg0, %c0_i32 : i32, i32
  }
  func.func @transform_3(%arg0: i32) -> (i32, i32) {
    %c0_i32 = arith.constant 0 : i32
    %c0_i32_0 = arith.constant 0 : i32
    return %arg0, %c0_i32 : i32, i32
  }
  func.func @transform_4(%arg0: i32) -> (i32, i32) {
    %c0_i32 = arith.constant 0 : i32
    %c0_i32_0 = arith.constant 0 : i32
    return %arg0, %c0_i32 : i32, i32
  }
}

</mosaic_0001>

<llo_original>
// kernel: tpu_custom_call.1
$region0: #{tpu_custom_call.1}
  #allocation0 [shape = 'u32[]', space=smem, size = 0x4, offset = 0x4, fixed_abs, tag = 'smem constant byte address 0x4 - core index']
  #allocation1 [shape = 'u32[144,128]{1,0:T(1,128)}', space=vmem, size = 0x12000, scoped, tag = 'internal scratch']
  %s0 = inlined_call_operand.vmem [shape: f32[8,32], index: 0, kind: input, shape index: {}]
  %s1 = inlined_call_operand.hbm [shape: f32[8,32], index: 1, kind: input, shape index: {}]
  %s2 = inlined_call_operand.vmem [shape: s32[8,1], index: 2, kind: input, shape index: {}]
  %s3 = inlined_call_operand.vmem [shape: f32[8,1], index: 3, kind: output, shape index: {0}]
  %s4 = inlined_call_operand.vmem [shape: f32[8,1], index: 4, kind: output, shape index: {1}]
  %5 = xla_tuple %s3, %s4
  %s6 = sld [smem:[#allocation0]]
  $region34: #{tpu_custom_call.1} parent=0
    _
  %s8 = ssub.s32 1, %s6
  %s9 = scalar_select 0, %s8, %s6
  $region1: #{tpu_custom_call.1} parent=0
    #allocation2 [shape = 'u8[4096]{0}', space=vmem, size = 0x1000, scoped, tag = 'input window, operand 1, single buffered']
    #allocation3 [shape = 's32[1]{0}', space=sflag, size = 0x4, scoped, tag = 'scoped memory for tpu_custom_call.1']
    %10 = vsyncpa [#allocation3], 0
    // Predicated region
    $region2: #{tpu_custom_call.1} parent=1 // pred_check
      _
    $region3: #{tpu_custom_call.1} parent=1 // pred_check_branch
      %12 = sbr.rel (0) target = $region5
    $region4: #{tpu_custom_call.1} parent=1 // pred_region
      _
    $region5: #{tpu_custom_call.1} parent=1 // pred_fallthru
      _
    // Predicated region
    $region6: #{tpu_custom_call.1} parent=1 // pred_check
      _
    $region7: #{tpu_custom_call.1} parent=1 // pred_check_branch
      %14 = sbr.rel (0) target = $region9
    $region8: #{tpu_custom_call.1} parent=1 // pred_region
      %s16 = ssub.s32 128, 128
      %17 = vsyncadd [#allocation3], %s16
      %s19 = sshll.u32 [#allocation2], 4
      %s20 = int_to_ptr.vmem [resolvable:$true] %s19
      %22 = dma.hbm_to_vmem [thread:$0]  %s1, 128, %s20, [#allocation3]
    $region9: #{tpu_custom_call.1} parent=1 // pred_fallthru
      _
    // Predicated region
    $region10: #{tpu_custom_call.1} parent=1 // pred_check
      _
    $region11: #{tpu_custom_call.1} parent=1 // pred_check_branch
      %24 = sbr.rel (0) target = $region13
    $region12: #{tpu_custom_call.1} parent=1 // pred_region
      _
    $region13: #{tpu_custom_call.1} parent=1 // pred_fallthru
      _
    // Predicated region
    $region14: #{tpu_custom_call.1} parent=1 // pred_check
      _
    $region15: #{tpu_custom_call.1} parent=1 // pred_check_branch
      %26 = sbr.rel (0) target = $region17
    $region16: #{tpu_custom_call.1} parent=1 // pred_region
      %27 = dma.done [#allocation3], 128
    $region17: #{tpu_custom_call.1} parent=1 // pred_fallthru
      _
    %v28 = vld [vmem:[%s0] sm:$0xff]
    %v29 = vmul.f32 %v28, 0.25
    %v30 = vld [vmem:[#allocation2] sm:$0xff]
    %v31 = vmul.f32 %v30, 0.25
    %vm32 = vcmask 261120
    %v33 = vsel %vm32, %v29, -inf
    %34 = vmax.xlane.f32.xlu0 %v33
    %v35 = vpop.xlane.xlu0 %34
    %v36 = vsub.f32 %v29, %v35
    %v37 = vmul.f32 %v36, 1.442695
    %v38 = vpow.pop %v37
    %v39 = vsel %vm32, %v38, 0.0
    %40 = vadd.xlane.f32.xlu0 %v39
    %v41 = vpop.xlane.xlu0 %40
    %v42 = vlog2.pop %v41
    %v43 = vmul.f32 %v42, 0.6931472
    %v44 = vsub.f32 %v36, %v43
    %v45 = vsel %vm32, %v31, -inf
    %46 = vmax.xlane.f32.xlu0 %v45
    %v47 = vpop.xlane.xlu0 %46
    %v48 = vsub.f32 %v31, %v47
    %v49 = vmul.f32 %v48, 1.442695
    %v50 = vpow.pop %v49
    %v51 = vsel %vm32, %v50, 0.0
    %52 = vadd.xlane.f32.xlu0 %v51
    %v53 = vpop.xlane.xlu0 %52
    %v54 = vrcp.pop %v53
    %v55 = vmul.f32 %v50, %v54
    %v56 = vlog2.pop %v53
    %v57 = vmul.f32 %v56, 0.6931472
    %v58 = vsub.f32 %v48, %v57
    %v59 = vlaneseq
    %v60 = vand.u32 %v59, 127
    %vm61 = vcmp.eq.f32.partialorder %v31, %v47
    %v62 = vsel %vm61, %v60, 32
    %v63 = vsel %vm32, %v62, 2147483647
    %v64 = vand.u32 %v63, 65535
    %v65 = vshra.s32 %v63, 16
    %v66 = vcvt.s32.f32 %v64
    %v67 = vcvt.s32.f32 %v65
    %68 = vmin.xlane.f32.xlu0 %v67
    %v69 = vpop.xlane.xlu0 %68
    %vm70 = vcmp.eq.f32.partialorder %v67, %v69
    %v71 = vsel %vm70, %v66, inf
    %72 = vmin.xlane.f32.xlu0 %v71
    %v73 = vpop.xlane.xlu0 %72
    %v74 = vcvt.f32.s32 %v73
    %v75 = vcvt.f32.s32 %v69
    %v76 = vshll.u32 %v75, 16
    %v77 = vadd.s32 %v76, %v74
    %v78 = vld [vmem:[%s2] sm:$0xff]
    %vm79 = vcmp.eq.s32.totalorder %v78, %v77
    %v80 = vsel %vm79, 1, 0
    %v81 = vcvt.s32.f32 %v80
    %v82 = vsub.f32 %v58, %v44
    %v83 = vmul.f32 %v55, %v82
    %v84 = vsel %vm32, %v83, 0.0
    %85 = vadd.xlane.f32.xlu0 %v84
    %v86 = vpop.xlane.xlu0 %85
    %vm87 = vcmask 7168
    %88 = vst.msk [vmem:[%s3] sm:$0xff] %vm87, %v81
    %v89 = vmul.f32 %v81, %v86
    %90 = vst.msk [vmem:[%s4] sm:$0xff] %vm87, %v89
    // Predicated region
    $region18: #{tpu_custom_call.1} parent=1 // pred_check
      _
    $region19: #{tpu_custom_call.1} parent=1 // pred_check_branch
      %92 = sbr.rel (0) target = $region21
    $region20: #{tpu_custom_call.1} parent=1 // pred_region
      _
    $region21: #{tpu_custom_call.1} parent=1 // pred_fallthru
      _
    // Predicated region
    $region22: #{tpu_custom_call.1} parent=1 // pred_check
      _
    $region23: #{tpu_custom_call.1} parent=1 // pred_check_branch
      %94 = sbr.rel (0) target = $region25
    $region24: #{tpu_custom_call.1} parent=1 // pred_region
      _
    $region25: #{tpu_custom_call.1} parent=1 // pred_fallthru
      _
    // Predicated region
    $region26: #{tpu_custom_call.1} parent=1 // pred_check
      _
    $region27: #{tpu_custom_call.1} parent=1 // pred_check_branch
      %96 = sbr.rel (0) target = $region29
    $region28: #{tpu_custom_call.1} parent=1 // pred_region
      _
    $region29: #{tpu_custom_call.1} parent=1 // pred_fallthru
      _
    // Predicated region
    $region30: #{tpu_custom_call.1} parent=1 // pred_check
      _
    $region31: #{tpu_custom_call.1} parent=1 // pred_check_branch
      %98 = sbr.rel (0) target = $region33
    $region32: #{tpu_custom_call.1} parent=1 // pred_region
      _
    $region33: #{tpu_custom_call.1} parent=1 // pred_fallthru
      _
    %99 = vsyncpa [#allocation3], 1

</llo_original>
